<compile_context>
chip_gen: v7x
topology: tpu7x:2x2x1
jax: 0.10.0
libtpu: 0.0.40
codegen_flags: <defaults>
</compile_context>

<pallas_src>
import functools

import jax
import jax.numpy as jnp
from jax.experimental import pallas as pl
from jax.experimental.pallas import tpu as pltpu

LANE = 128


def _round_up(n, m):
    return ((n + m - 1) // m) * m


# ----------------------------- Pallas kernel ------------------------------- #
def _hnet_kernel(x_ref, p_ref, out_ref, *, num_layers, pad_w, x_width):
    """Whole hNet MLP (d_p_transform pre-folded into layer 4) in one step.

    x_ref  : (1, x_width)  flattened input (x.view(-1))
    p_ref  : (num_layers*pad_w + bias_rows, pad_w) packed params:
               rows [l*pad_w, l*pad_w + n_in_l)  = transposed weight of layer l
               row  num_layers*pad_w + l         = bias of layer l
             everything zero-padded to pad_w lanes.
    out_ref: (1, pad_w)    full-lane (unmasked) store; wrapper slices to out_w.
    """
    f32 = jnp.float32
    bias_row0 = num_layers * pad_w
    h = x_ref[...]                                          # (1, x_width)
    for li in range(num_layers):
        n_in = x_width if li == 0 else pad_w
        w = p_ref[li * pad_w: li * pad_w + n_in, :]         # static slice
        b = p_ref[bias_row0 + li: bias_row0 + li + 1, :]    # (1, pad_w)
        h = jnp.dot(h, w, preferred_element_type=f32) + b
        if li < num_layers - 1:
            h = jnp.maximum(h, 0.0)                         # ReLU
    out_ref[...] = h


# ------------------- one-time parameter preprocessing ---------------------- #
def _dp_matrix(d):
    """(d^2+d, 2d^2) 0/+1/-1 matrix T with  theta @ T == d_p_transform(theta, d)."""
    d_sq = d * d
    tw, ow = d_sq + d, 2 * d_sq
    r = jnp.arange(tw)[:, None]
    c = jnp.arange(ow)[None, :]
    k = jnp.maximum(c - d_sq, 0)
    ident = (c < d_sq) & (r == c)
    plus = (c >= d_sq) & (r == d_sq + k // d)
    minus = (c >= d_sq) & (r == d_sq + k % d)
    f32 = jnp.float32
    return ident.astype(f32) + plus.astype(f32) - minus.astype(f32)


def prepare_hnet_params(params, *, d, d_p_flag):
    """Off the hot path: transpose torch-layout weights, fold d_p_transform into
    the last layer, zero-pad everything to pad_w lanes and pack into ONE buffer
    (a single parameter DMA per forward call)."""
    Ws = [jnp.asarray(W, jnp.float32).T for (W, _) in params]   # (n_in, n_out)
    Bs = [jnp.asarray(B, jnp.float32) for (_, B) in params]
    if d_p_flag:
        assert Ws[-1].shape[1] == d * d + d, \
            "d_p_transform requires theta_width = d^2 + d"
        T = _dp_matrix(d)
        Ws[-1] = Ws[-1] @ T            # fold transform into last weight / bias
        Bs[-1] = Bs[-1] @ T

    num_layers = len(Ws)
    x_width = Ws[0].shape[0]
    out_w = Ws[-1].shape[1]
    pad_w = _round_up(max([x_width] + [W.shape[1] for W in Ws]), LANE)
    bias_rows = _round_up(num_layers, 8)

    packed = jnp.zeros((num_layers * pad_w + bias_rows, pad_w), jnp.float32)
    for li, (W, B) in enumerate(zip(Ws, Bs)):
        packed = packed.at[li * pad_w: li * pad_w + W.shape[0],
                           :W.shape[1]].set(W)
        packed = packed.at[num_layers * pad_w + li, :B.shape[0]].set(B)

    meta = dict(num_layers=num_layers, pad_w=pad_w,
                x_width=x_width, out_w=out_w)
    return packed, meta


def make_hnet_forward(meta):
    num_layers, pad_w = meta["num_layers"], meta["pad_w"]
    x_width, out_w = meta["x_width"], meta["out_w"]
    kernel = functools.partial(_hnet_kernel, num_layers=num_layers,
                               pad_w=pad_w, x_width=x_width)
    # No grid: one step, everything resident in VMEM, no pipeline bookkeeping.
    call = pl.pallas_call(
        kernel,
        out_shape=jax.ShapeDtypeStruct((1, pad_w), jnp.float32),
        in_specs=[pl.BlockSpec(memory_space=pltpu.MemorySpace.VMEM),
                  pl.BlockSpec(memory_space=pltpu.MemorySpace.VMEM)],
        out_specs=pl.BlockSpec(memory_space=pltpu.MemorySpace.VMEM),
    )

    @jax.jit
    def forward(x, packed):
        x_flat = x.reshape(1, -1).astype(jnp.float32)   # x.view(-1)
        out = call(x_flat, packed)
        return out[0, :out_w]                           # 1-D theta, like torch

    return forward


# ------------------------- deterministic parameters ------------------------ #
def init_params(key, d, batch_size, hidden=(32, 32, 32), theta_width=20):
    # torch nn.Linear layout: W (n_out, n_in), b (n_out,), U(-1/sqrt(n_in), ..)
    widths = (d * batch_size,) + tuple(hidden) + (theta_width,)
    params = []
    for n_in, n_out in zip(widths[:-1], widths[1:]):
        key, kw, kb = jax.random.split(key, 3)
        bound = n_in ** -0.5
        W = jax.random.uniform(kw, (n_out, n_in), jnp.float32, -bound, bound)
        B = jax.random.uniform(kb, (n_out,), jnp.float32, -bound, bound)
        params.append((W, B))
    return params


# ----------------------------- pure-JAX reference -------------------------- #
def hnet_reference(x, params, d, d_p_flag):
    h = x.reshape(-1)
    n = len(params)
    for li, (W, B) in enumerate(params):
        h = h @ W.T + B
        if li < n - 1:
            h = jax.nn.relu(h)
    if d_p_flag:
        d_sq = d * d
        theta_d = h[:d_sq]
        theta_p = h[d_sq:]
        diff = theta_p[:, None] - theta_p[None, :]
        h = jnp.concatenate([theta_d, diff.reshape(d_sq)])
    return h


# ---------------------------------- main ----------------------------------- #
if __name__ == "__main__":
    d, batch_size = 4, 2
    hidden = (32, 32, 32)

    key = jax.random.PRNGKey(0)
    kx, kp1, kp2 = jax.random.split(key, 3)
    x = jax.random.normal(kx, (batch_size, d), jnp.float32)

    # Case 1: d_p_flag=True (theta_width must be d^2 + d)
    params_dp = init_params(kp1, d, batch_size, hidden, theta_width=d * d + d)
    packed_dp, meta_dp = prepare_hnet_params(params_dp, d=d, d_p_flag=True)
    fwd_dp = make_hnet_forward(meta_dp)
    theta_dp = jax.block_until_ready(fwd_dp(x, packed_dp))
    ref_dp = hnet_reference(x, params_dp, d, True)
    assert theta_dp.shape == ref_dp.shape
    assert jnp.allclose(theta_dp, ref_dp, atol=1e-4, rtol=1e-4), "d_p theta mismatch"

    # Case 2: plain MLP head (d_p_flag=False)
    params_plain = init_params(kp2, d, batch_size, hidden, theta_width=32)
    packed_p, meta_p = prepare_hnet_params(params_plain, d=d, d_p_flag=False)
    fwd_p = make_hnet_forward(meta_p)
    theta = jax.block_until_ready(fwd_p(x, packed_p))
    ref = hnet_reference(x, params_plain, d, False)
    assert theta.shape == ref.shape
    assert jnp.allclose(theta, ref, atol=1e-4, rtol=1e-4), "theta mismatch"

    print("KERNEL_OK")
</pallas_src>

<mosaic_0001>
module attributes {stable_mosaic.version = 11 : i64} {
  func.func @_hnet_kernel(%arg0: memref<1x8xf32, #tpu.memory_space<vmem>>, %arg1: memref<520x128xf32, #tpu.memory_space<vmem>>, %arg2: memref<1x128xf32, #tpu.memory_space<vmem>>) attributes {dimension_semantics = [], scalar_prefetch = 0 : i64, scratch_operands = 0 : i64, tpu.core_type = #tpu.core_type<tc>} {
    %c0 = arith.constant 0 : index
    %c0_0 = arith.constant 0 : index
    %0 = vector.load %arg0[%c0, %c0_0] : memref<1x8xf32, #tpu.memory_space<vmem>>, vector<1x8xf32>
    %c0_1 = arith.constant 0 : index
    %c0_2 = arith.constant 0 : index
    %1 = vector.load %arg1[%c0_1, %c0_2] : memref<520x128xf32, #tpu.memory_space<vmem>>, vector<8x128xf32>
    %c512 = arith.constant 512 : index
    %c0_3 = arith.constant 0 : index
    %2 = vector.load %arg1[%c512, %c0_3] : memref<520x128xf32, #tpu.memory_space<vmem>>, vector<1x128xf32>
    %cst = arith.constant dense<0.000000e+00> : vector<1x128xf32>
    %3 = tpu.matmul %0, %1, %cst {dimension_numbers = #tpu.dot_dimension_numbers<[1], [0], [0], [1], [0, 0, 1, 1], [], []>} : vector<1x8xf32>, vector<8x128xf32>, vector<1x128xf32> -> vector<1x128xf32>
    %4 = arith.addf %3, %2 : vector<1x128xf32>
    %cst_4 = arith.constant 0.000000e+00 : f32
    %5 = vector.broadcast %cst_4 : f32 to vector<1x128xf32>
    %6 = arith.maximumf %4, %5 : vector<1x128xf32>
    %c128 = arith.constant 128 : index
    %c0_5 = arith.constant 0 : index
    %7 = vector.load %arg1[%c128, %c0_5] : memref<520x128xf32, #tpu.memory_space<vmem>>, vector<128x128xf32>
    %c513 = arith.constant 513 : index
    %c0_6 = arith.constant 0 : index
    %8 = vector.load %arg1[%c513, %c0_6] : memref<520x128xf32, #tpu.memory_space<vmem>>, vector<1x128xf32>
    %cst_7 = arith.constant dense<0.000000e+00> : vector<1x128xf32>
    %9 = tpu.matmul %6, %7, %cst_7 {dimension_numbers = #tpu.dot_dimension_numbers<[1], [0], [0], [1], [0, 0, 1, 1], [], []>} : vector<1x128xf32>, vector<128x128xf32>, vector<1x128xf32> -> vector<1x128xf32>
    %10 = arith.addf %9, %8 : vector<1x128xf32>
    %cst_8 = arith.constant 0.000000e+00 : f32
    %11 = vector.broadcast %cst_8 : f32 to vector<1x128xf32>
    %12 = arith.maximumf %10, %11 : vector<1x128xf32>
    %c256 = arith.constant 256 : index
    %c0_9 = arith.constant 0 : index
    %13 = vector.load %arg1[%c256, %c0_9] : memref<520x128xf32, #tpu.memory_space<vmem>>, vector<128x128xf32>
    %c514 = arith.constant 514 : index
    %c0_10 = arith.constant 0 : index
    %14 = vector.load %arg1[%c514, %c0_10] : memref<520x128xf32, #tpu.memory_space<vmem>>, vector<1x128xf32>
    %cst_11 = arith.constant dense<0.000000e+00> : vector<1x128xf32>
    %15 = tpu.matmul %12, %13, %cst_11 {dimension_numbers = #tpu.dot_dimension_numbers<[1], [0], [0], [1], [0, 0, 1, 1], [], []>} : vector<1x128xf32>, vector<128x128xf32>, vector<1x128xf32> -> vector<1x128xf32>
    %16 = arith.addf %15, %14 : vector<1x128xf32>
    %cst_12 = arith.constant 0.000000e+00 : f32
    %17 = vector.broadcast %cst_12 : f32 to vector<1x128xf32>
    %18 = arith.maximumf %16, %17 : vector<1x128xf32>
    %c384 = arith.constant 384 : index
    %c0_13 = arith.constant 0 : index
    %19 = vector.load %arg1[%c384, %c0_13] : memref<520x128xf32, #tpu.memory_space<vmem>>, vector<128x128xf32>
    %c515 = arith.constant 515 : index
    %c0_14 = arith.constant 0 : index
    %20 = vector.load %arg1[%c515, %c0_14] : memref<520x128xf32, #tpu.memory_space<vmem>>, vector<1x128xf32>
    %cst_15 = arith.constant dense<0.000000e+00> : vector<1x128xf32>
    %21 = tpu.matmul %18, %19, %cst_15 {dimension_numbers = #tpu.dot_dimension_numbers<[1], [0], [0], [1], [0, 0, 1, 1], [], []>} : vector<1x128xf32>, vector<128x128xf32>, vector<1x128xf32> -> vector<1x128xf32>
    %22 = arith.addf %21, %20 : vector<1x128xf32>
    %c0_16 = arith.constant 0 : index
    %c0_17 = arith.constant 0 : index
    %23 = vector.load %arg2[%c0_16, %c0_17] : memref<1x128xf32, #tpu.memory_space<vmem>>, vector<1x128xf32>
    tpu.vector_store %arg2[%c0_16, %c0_17], %22 {strides = array<i32>} : memref<1x128xf32, #tpu.memory_space<vmem>>, vector<1x128xf32>,
    return
  }
}

</mosaic_0001>

<llo_original>
// kernel: forward.1
$region0: #{forward.1}
  #allocation0 [shape = 'u32[]', space=smem, size = 0x4, offset = 0x4, fixed_abs, tag = 'smem constant byte address 0x4 - core index']
  #allocation1 [shape = 'u32[144,128]{1,0:T(1,128)}', space=vmem, size = 0x12000, scoped, tag = 'internal scratch']
  %s0 = inlined_call_operand.vmem [shape: f32[1,8], index: 0, kind: input, shape index: {}]
  %s1 = inlined_call_operand.hbm [shape: f32[520,128], index: 1, kind: input, shape index: {}]
  %s2 = inlined_call_operand.vmem [shape: f32[1,128], index: 2, kind: output, shape index: {}]
  %s3 = sld [smem:[#allocation0]]
  $region22: #{forward.1} parent=0
    _
  %s5 = ssub.s32 1, %s3
  %s6 = scalar_select 0, %s5, %s3
  $region1: #{forward.1} parent=0
    #allocation2 [shape = 'u8[266240]{0}', space=vmem, size = 0x41000, scoped, tag = 'input window, operand 1, single buffered']
    #allocation3 [shape = 's32[1]{0}', space=sflag, size = 0x4, scoped, tag = 'scoped memory for forward.1']
    %7 = vsyncpa [#allocation3], 0
    // Predicated region
    $region2: #{forward.1} parent=1 // pred_check
      _
    $region3: #{forward.1} parent=1 // pred_check_branch
      %9 = sbr.rel (0) target = $region5
    $region4: #{forward.1} parent=1 // pred_region
      _
    $region5: #{forward.1} parent=1 // pred_fallthru
      _
    // Predicated region
    $region6: #{forward.1} parent=1 // pred_check
      _
    $region7: #{forward.1} parent=1 // pred_check_branch
      %11 = sbr.rel (0) target = $region9
    $region8: #{forward.1} parent=1 // pred_region
      %s13 = ssub.s32 8320, 8320
      %14 = vsyncadd [#allocation3], %s13
      %s15 = sshll.u32 [#allocation2], 4
      %s16 = int_to_ptr.vmem [resolvable:$true] %s15
      %21 = dma.hbm_to_vmem [thread:$0]  %s1, 8320, %s16, [#allocation3], 128, 128, 8
    $region9: #{forward.1} parent=1 // pred_fallthru
      _
    // Predicated region
    $region10: #{forward.1} parent=1 // pred_check
      _
    $region11: #{forward.1} parent=1 // pred_check_branch
      %23 = sbr.rel (0) target = $region13
    $region12: #{forward.1} parent=1 // pred_region
      %24 = dma.done [#allocation3], 8320
    $region13: #{forward.1} parent=1 // pred_fallthru
      _
    %v25 = vld [vmem:[%s0] sm:$0x1]
    %v26 = vld [vmem:[#allocation2] sm:$0xff]
    %v27 = vld [vmem:[#allocation2 + $0x200] sm:$0x1]
    %vm28 = vcmask 64512
    %v30 = vsel %vm28, %v25, 0
    %32 = vmatprep.subr.mxu0 0.0
    %33 = vmatpush1.msra.mxu0 %v26
    %34 = vmatprep.subr.mxu0 0.0
    %35 = vmatpush1.msra.mxu0 0.0
    %36 = vmatprep.subr.mxu0 0.0
    %37 = vmatpush1.msra.mxu0 0.0
    %38 = vmatprep.subr.mxu0 0.0
    %39 = vmatpush1.msra.mxu0 0.0
    %40 = vmatprep.subr.mxu0 0.0
    %41 = vmatpush1.msra.mxu0 0.0
    %42 = vmatprep.subr.mxu0 0.0
    %43 = vmatpush1.msra.mxu0 0.0
    %44 = vmatprep.subr.mxu0 0.0
    %45 = vmatpush1.msra.mxu0 0.0
    %46 = vmatprep.subr.mxu0 0.0
    %47 = vmatpush1.msra.mxu0 0.0
    %48 = vmatprep.subr.mxu0 0.0
    %49 = vmatpush1.msra.mxu0 0.0
    %50 = vmatprep.subr.mxu0 0.0
    %51 = vmatpush1.msra.mxu0 0.0
    %52 = vmatprep.subr.mxu0 0.0
    %53 = vmatpush1.msra.mxu0 0.0
    %54 = vmatprep.subr.mxu0 0.0
    %55 = vmatpush1.msra.mxu0 0.0
    %56 = vmatprep.subr.mxu0 0.0
    %57 = vmatpush1.msra.mxu0 0.0
    %58 = vmatprep.subr.mxu0 0.0
    %59 = vmatpush1.msra.mxu0 0.0
    %60 = vmatprep.subr.mxu0 0.0
    %61 = vmatpush1.msra.mxu0 0.0
    %62 = vmatprep.subr.mxu0 0.0
    %63 = vmatpush1.msra.mxu0 0.0
    %64 = vmatprep.subr.mxu0 0.0
    %65 = vmatpush1.msra.mxu0 0.0
    %66 = vmatprep.subr.mxu0 0.0
    %67 = vmatpush1.msra.mxu0 0.0
    %68 = vmatprep.subr.mxu0 0.0
    %69 = vmatpush1.msra.mxu0 0.0
    %70 = vmatprep.subr.mxu0 0.0
    %71 = vmatpush1.msra.mxu0 0.0
    %72 = vmatprep.subr.mxu0 0.0
    %73 = vmatpush1.msra.mxu0 0.0
    %74 = vmatprep.subr.mxu0 0.0
    %75 = vmatpush1.msra.mxu0 0.0
    %76 = vmatprep.subr.mxu0 0.0
    %77 = vmatpush1.msra.mxu0 0.0
    %78 = vmatprep.subr.mxu0 0.0
    %79 = vmatpush1.msra.mxu0 0.0
    %80 = vmatprep.subr.mxu0 0.0
    %81 = vmatpush1.msra.mxu0 0.0
    %82 = vmatprep.subr.mxu0 0.0
    %83 = vmatpush1.msra.mxu0 0.0
    %84 = vmatprep.subr.mxu0 0.0
    %85 = vmatpush1.msra.mxu0 0.0
    %86 = vmatprep.subr.mxu0 0.0
    %87 = vmatpush1.msra.mxu0 0.0
    %88 = vmatprep.subr.mxu0 0.0
    %89 = vmatpush1.msra.mxu0 0.0
    %90 = vmatprep.subr.mxu0 0.0
    %91 = vmatpush1.msra.mxu0 0.0
    %92 = vmatprep.subr.mxu0 0.0
    %93 = vmatpush1.msra.mxu0 0.0
    %94 = vmatprep.subr.mxu0 0.0
    %95 = vmatpush1.msra.mxu0 0.0
    %96 = vmatprep.mubr.f32.mxu0 0.0
    %97 = vmatmul.mubr.f32.gmra.mrb[0].mxu0 %v30
    %v98 = vpop.f32.mrb[0].mxu0
    %v99 = vadd.f32 %v27, %v98
    %v100 = vpop.f32.mrb[0].mxu0
    %101 = vdwg.mxu0
    %v102 = vmax.f32 %v99, 0.0
    %v103 = vld [vmem:[#allocation2 + $0x80] sm:$0xff]
    %v104 = vld [vmem:[#allocation2 + $0x88] sm:$0xff]
    %v105 = vld [vmem:[#allocation2 + $0x90] sm:$0xff]
    %v106 = vld [vmem:[#allocation2 + $0x98] sm:$0xff]
    %v107 = vld [vmem:[#allocation2 + $0xa0] sm:$0xff]
    %v108 = vld [vmem:[#allocation2 + $0xa8] sm:$0xff]
    %v109 = vld [vmem:[#allocation2 + $0xb0] sm:$0xff]
    %v110 = vld [vmem:[#allocation2 + $0xb8] sm:$0xff]
    %v111 = vld [vmem:[#allocation2 + $0xc0] sm:$0xff]
    %v112 = vld [vmem:[#allocation2 + $0xc8] sm:$0xff]
    %v113 = vld [vmem:[#allocation2 + $0xd0] sm:$0xff]
    %v114 = vld [vmem:[#allocation2 + $0xd8] sm:$0xff]
    %v115 = vld [vmem:[#allocation2 + $0xe0] sm:$0xff]
    %v116 = vld [vmem:[#allocation2 + $0xe8] sm:$0xff]
    %v117 = vld [vmem:[#allocation2 + $0xf0] sm:$0xff]
    %v118 = vld [vmem:[#allocation2 + $0xf8] sm:$0xff]
    %v119 = vld [vmem:[#allocation2 + $0x201] sm:$0x1]
    %120 = vmatprep.subr.mxu0 0.0
    %121 = vmatpush1.msra.mxu0 %v103
    %122 = vmatprep.subr.mxu0 0.0
    %123 = vmatpush1.msra.mxu0 %v104
    %124 = vmatprep.subr.mxu0 0.0
    %125 = vmatpush1.msra.mxu0 %v105
    %126 = vmatprep.subr.mxu0 0.0
    %127 = vmatpush1.msra.mxu0 %v106
    %128 = vmatprep.subr.mxu0 0.0
    %129 = vmatpush1.msra.mxu0 %v107
    %130 = vmatprep.subr.mxu0 0.0
    %131 = vmatpush1.msra.mxu0 %v108
    %132 = vmatprep.subr.mxu0 0.0
    %133 = vmatpush1.msra.mxu0 %v109
    %134 = vmatprep.subr.mxu0 0.0
    %135 = vmatpush1.msra.mxu0 %v110
    %136 = vmatprep.subr.mxu0 0.0
    %137 = vmatpush1.msra.mxu0 %v111
    %138 = vmatprep.subr.mxu0 0.0
    %139 = vmatpush1.msra.mxu0 %v112
    %140 = vmatprep.subr.mxu0 0.0
    %141 = vmatpush1.msra.mxu0 %v113
    %142 = vmatprep.subr.mxu0 0.0
    %143 = vmatpush1.msra.mxu0 %v114
    %144 = vmatprep.subr.mxu0 0.0
    %145 = vmatpush1.msra.mxu0 %v115
    %146 = vmatprep.subr.mxu0 0.0
    %147 = vmatpush1.msra.mxu0 %v116
    %148 = vmatprep.subr.mxu0 0.0
    %149 = vmatpush1.msra.mxu0 %v117
    %150 = vmatprep.subr.mxu0 0.0
    %151 = vmatpush1.msra.mxu0 %v118
    %152 = vmatprep.subr.mxu0 0.0
    %153 = vmatpush1.msra.mxu0 0.0
    %154 = vmatprep.subr.mxu0 0.0
    %155 = vmatpush1.msra.mxu0 0.0
    %156 = vmatprep.subr.mxu0 0.0
    %157 = vmatpush1.msra.mxu0 0.0
    %158 = vmatprep.subr.mxu0 0.0
    %159 = vmatpush1.msra.mxu0 0.0
    %160 = vmatprep.subr.mxu0 0.0
    %161 = vmatpush1.msra.mxu0 0.0
    %162 = vmatprep.subr.mxu0 0.0
    %163 = vmatpush1.msra.mxu0 0.0
    %164 = vmatprep.subr.mxu0 0.0
    %165 = vmatpush1.msra.mxu0 0.0
    %166 = vmatprep.subr.mxu0 0.0
    %167 = vmatpush1.msra.mxu0 0.0
    %168 = vmatprep.subr.mxu0 0.0
    %169 = vmatpush1.msra.mxu0 0.0
    %170 = vmatprep.subr.mxu0 0.0
    %171 = vmatpush1.msra.mxu0 0.0
    %172 = vmatprep.subr.mxu0 0.0
    %173 = vmatpush1.msra.mxu0 0.0
    %174 = vmatprep.subr.mxu0 0.0
    %175 = vmatpush1.msra.mxu0 0.0
    %176 = vmatprep.subr.mxu0 0.0
    %177 = vmatpush1.msra.mxu0 0.0
    %178 = vmatprep.subr.mxu0 0.0
    %179 = vmatpush1.msra.mxu0 0.0
    %180 = vmatprep.subr.mxu0 0.0
    %181 = vmatpush1.msra.mxu0 0.0
    %182 = vmatprep.subr.mxu0 0.0
    %183 = vmatpush1.msra.mxu0 0.0
    %184 = vmatprep.mubr.f32.mxu0 0.0
    %185 = vmatmul.mubr.f32.gmra.mrb[0].mxu0 %v102
    %v186 = vpop.f32.mrb[0].mxu0
    %v187 = vadd.f32 %v119, %v186
    %v188 = vpop.f32.mrb[0].mxu0
    %189 = vdwg.mxu0
    %v190 = vmax.f32 %v187, 0.0
    %v191 = vld [vmem:[#allocation2 + $0x100] sm:$0xff]
    %v192 = vld [vmem:[#allocation2 + $0x108] sm:$0xff]
    %v193 = vld [vmem:[#allocation2 + $0x110] sm:$0xff]
    %v194 = vld [vmem:[#allocation2 + $0x118] sm:$0xff]
    %v195 = vld [vmem:[#allocation2 + $0x120] sm:$0xff]
    %v196 = vld [vmem:[#allocation2 + $0x128] sm:$0xff]
    %v197 = vld [vmem:[#allocation2 + $0x130] sm:$0xff]
    %v198 = vld [vmem:[#allocation2 + $0x138] sm:$0xff]
    %v199 = vld [vmem:[#allocation2 + $0x140] sm:$0xff]
    %v200 = vld [vmem:[#allocation2 + $0x148] sm:$0xff]
    %v201 = vld [vmem:[#allocation2 + $0x150] sm:$0xff]
    %v202 = vld [vmem:[#allocation2 + $0x158] sm:$0xff]
    %v203 = vld [vmem:[#allocation2 + $0x160] sm:$0xff]
    %v204 = vld [vmem:[#allocation2 + $0x168] sm:$0xff]
    %v205 = vld [vmem:[#allocation2 + $0x170] sm:$0xff]
    %v206 = vld [vmem:[#allocation2 + $0x178] sm:$0xff]
    %v207 = vld [vmem:[#allocation2 + $0x202] sm:$0x1]
    %208 = vmatprep.subr.mxu0 0.0
    %209 = vmatpush1.msra.mxu0 %v191
    %210 = vmatprep.subr.mxu0 0.0
    %211 = vmatpush1.msra.mxu0 %v192
    %212 = vmatprep.subr.mxu0 0.0
    %213 = vmatpush1.msra.mxu0 %v193
    %214 = vmatprep.subr.mxu0 0.0
    %215 = vmatpush1.msra.mxu0 %v194
    %216 = vmatprep.subr.mxu0 0.0
    %217 = vmatpush1.msra.mxu0 %v195
    %218 = vmatprep.subr.mxu0 0.0
    %219 = vmatpush1.msra.mxu0 %v196
    %220 = vmatprep.subr.mxu0 0.0
    %221 = vmatpush1.msra.mxu0 %v197
    %222 = vmatprep.subr.mxu0 0.0
    %223 = vmatpush1.msra.mxu0 %v198
    %224 = vmatprep.subr.mxu0 0.0
    %225 = vmatpush1.msra.mxu0 %v199
    %226 = vmatprep.subr.mxu0 0.0
    %227 = vmatpush1.msra.mxu0 %v200
    %228 = vmatprep.subr.mxu0 0.0
    %229 = vmatpush1.msra.mxu0 %v201
    %230 = vmatprep.subr.mxu0 0.0
    %231 = vmatpush1.msra.mxu0 %v202
    %232 = vmatprep.subr.mxu0 0.0
    %233 = vmatpush1.msra.mxu0 %v203
    %234 = vmatprep.subr.mxu0 0.0
    %235 = vmatpush1.msra.mxu0 %v204
    %236 = vmatprep.subr.mxu0 0.0
    %237 = vmatpush1.msra.mxu0 %v205
    %238 = vmatprep.subr.mxu0 0.0
    %239 = vmatpush1.msra.mxu0 %v206
    %240 = vmatprep.subr.mxu0 0.0
    %241 = vmatpush1.msra.mxu0 0.0
    %242 = vmatprep.subr.mxu0 0.0
    %243 = vmatpush1.msra.mxu0 0.0
    %244 = vmatprep.subr.mxu0 0.0
    %245 = vmatpush1.msra.mxu0 0.0
    %246 = vmatprep.subr.mxu0 0.0
    %247 = vmatpush1.msra.mxu0 0.0
    %248 = vmatprep.subr.mxu0 0.0
    %249 = vmatpush1.msra.mxu0 0.0
    %250 = vmatprep.subr.mxu0 0.0
    %251 = vmatpush1.msra.mxu0 0.0
    %252 = vmatprep.subr.mxu0 0.0
    %253 = vmatpush1.msra.mxu0 0.0
    %254 = vmatprep.subr.mxu0 0.0
    %255 = vmatpush1.msra.mxu0 0.0
    %256 = vmatprep.subr.mxu0 0.0
    %257 = vmatpush1.msra.mxu0 0.0
    %258 = vmatprep.subr.mxu0 0.0
    %259 = vmatpush1.msra.mxu0 0.0
    %260 = vmatprep.subr.mxu0 0.0
    %261 = vmatpush1.msra.mxu0 0.0
    %262 = vmatprep.subr.mxu0 0.0
    %263 = vmatpush1.msra.mxu0 0.0
    %264 = vmatprep.subr.mxu0 0.0
    %265 = vmatpush1.msra.mxu0 0.0
    %266 = vmatprep.subr.mxu0 0.0
    %267 = vmatpush1.msra.mxu0 0.0
    %268 = vmatprep.subr.mxu0 0.0
    %269 = vmatpush1.msra.mxu0 0.0
    %270 = vmatprep.subr.mxu0 0.0
    %271 = vmatpush1.msra.mxu0 0.0
    %272 = vmatprep.mubr.f32.mxu0 0.0
    %273 = vmatmul.mubr.f32.gmra.mrb[0].mxu0 %v190
    %v274 = vpop.f32.mrb[0].mxu0
    %v275 = vadd.f32 %v207, %v274
    %v276 = vpop.f32.mrb[0].mxu0
    %277 = vdwg.mxu0
    %v278 = vmax.f32 %v275, 0.0
    %v279 = vld [vmem:[#allocation2 + $0x180] sm:$0xff]
    %v280 = vld [vmem:[#allocation2 + $0x188] sm:$0xff]
    %v281 = vld [vmem:[#allocation2 + $0x190] sm:$0xff]
    %v282 = vld [vmem:[#allocation2 + $0x198] sm:$0xff]
    %v283 = vld [vmem:[#allocation2 + $0x1a0] sm:$0xff]
    %v284 = vld [vmem:[#allocation2 + $0x1a8] sm:$0xff]
    %v285 = vld [vmem:[#allocation2 + $0x1b0] sm:$0xff]
    %v286 = vld [vmem:[#allocation2 + $0x1b8] sm:$0xff]
    %v287 = vld [vmem:[#allocation2 + $0x1c0] sm:$0xff]
    %v288 = vld [vmem:[#allocation2 + $0x1c8] sm:$0xff]
    %v289 = vld [vmem:[#allocation2 + $0x1d0] sm:$0xff]
    %v290 = vld [vmem:[#allocation2 + $0x1d8] sm:$0xff]
    %v291 = vld [vmem:[#allocation2 + $0x1e0] sm:$0xff]
    %v292 = vld [vmem:[#allocation2 + $0x1e8] sm:$0xff]
    %v293 = vld [vmem:[#allocation2 + $0x1f0] sm:$0xff]
    %v294 = vld [vmem:[#allocation2 + $0x1f8] sm:$0xff]
    %v295 = vld [vmem:[#allocation2 + $0x203] sm:$0x1]
    %296 = vmatprep.subr.mxu0 0.0
    %297 = vmatpush1.msra.mxu0 %v279
    %298 = vmatprep.subr.mxu0 0.0
    %299 = vmatpush1.msra.mxu0 %v280
    %300 = vmatprep.subr.mxu0 0.0
    %301 = vmatpush1.msra.mxu0 %v281
    %302 = vmatprep.subr.mxu0 0.0
    %303 = vmatpush1.msra.mxu0 %v282
    %304 = vmatprep.subr.mxu0 0.0
    %305 = vmatpush1.msra.mxu0 %v283
    %306 = vmatprep.subr.mxu0 0.0
    %307 = vmatpush1.msra.mxu0 %v284
    %308 = vmatprep.subr.mxu0 0.0
    %309 = vmatpush1.msra.mxu0 %v285
    %310 = vmatprep.subr.mxu0 0.0
    %311 = vmatpush1.msra.mxu0 %v286
    %312 = vmatprep.subr.mxu0 0.0
    %313 = vmatpush1.msra.mxu0 %v287
    %314 = vmatprep.subr.mxu0 0.0
    %315 = vmatpush1.msra.mxu0 %v288
    %316 = vmatprep.subr.mxu0 0.0
    %317 = vmatpush1.msra.mxu0 %v289
    %318 = vmatprep.subr.mxu0 0.0
    %319 = vmatpush1.msra.mxu0 %v290
    %320 = vmatprep.subr.mxu0 0.0
    %321 = vmatpush1.msra.mxu0 %v291
    %322 = vmatprep.subr.mxu0 0.0
    %323 = vmatpush1.msra.mxu0 %v292
    %324 = vmatprep.subr.mxu0 0.0
    %325 = vmatpush1.msra.mxu0 %v293
    %326 = vmatprep.subr.mxu0 0.0
    %327 = vmatpush1.msra.mxu0 %v294
    %328 = vmatprep.subr.mxu0 0.0
    %329 = vmatpush1.msra.mxu0 0.0
    %330 = vmatprep.subr.mxu0 0.0
    %331 = vmatpush1.msra.mxu0 0.0
    %332 = vmatprep.subr.mxu0 0.0
    %333 = vmatpush1.msra.mxu0 0.0
    %334 = vmatprep.subr.mxu0 0.0
    %335 = vmatpush1.msra.mxu0 0.0
    %336 = vmatprep.subr.mxu0 0.0
    %337 = vmatpush1.msra.mxu0 0.0
    %338 = vmatprep.subr.mxu0 0.0
    %339 = vmatpush1.msra.mxu0 0.0
    %340 = vmatprep.subr.mxu0 0.0
    %341 = vmatpush1.msra.mxu0 0.0
    %342 = vmatprep.subr.mxu0 0.0
    %343 = vmatpush1.msra.mxu0 0.0
    %344 = vmatprep.subr.mxu0 0.0
    %345 = vmatpush1.msra.mxu0 0.0
    %346 = vmatprep.subr.mxu0 0.0
    %347 = vmatpush1.msra.mxu0 0.0
    %348 = vmatprep.subr.mxu0 0.0
    %349 = vmatpush1.msra.mxu0 0.0
    %350 = vmatprep.subr.mxu0 0.0
    %351 = vmatpush1.msra.mxu0 0.0
    %352 = vmatprep.subr.mxu0 0.0
    %353 = vmatpush1.msra.mxu0 0.0
    %354 = vmatprep.subr.mxu0 0.0
    %355 = vmatpush1.msra.mxu0 0.0
    %356 = vmatprep.subr.mxu0 0.0
    %357 = vmatpush1.msra.mxu0 0.0
    %358 = vmatprep.subr.mxu0 0.0
    %359 = vmatpush1.msra.mxu0 0.0
    %360 = vmatprep.mubr.f32.mxu0 0.0
    %361 = vmatmul.mubr.f32.gmra.mrb[0].mxu0 %v278
    %v362 = vpop.f32.mrb[0].mxu0
    %v363 = vadd.f32 %v295, %v362
    %v364 = vpop.f32.mrb[0].mxu0
    %365 = vdwg.mxu0
    %366 = vst [vmem:[%s2] sm:$0x1] %v363
    // Predicated region
    $region14: #{forward.1} parent=1 // pred_check
      _
    $region15: #{forward.1} parent=1 // pred_check_branch
      %368 = sbr.rel (0) target = $region17
    $region16: #{forward.1} parent=1 // pred_region
      _
    $region17: #{forward.1} parent=1 // pred_fallthru
      _
    // Predicated region
    $region18: #{forward.1} parent=1 // pred_check
      _
    $region19: #{forward.1} parent=1 // pred_check_branch
      %370 = sbr.rel (0) target = $region21
    $region20: #{forward.1} parent=1 // pred_region
      _
    $region21: #{forward.1} parent=1 // pred_fallthru
      _
    %371 = vsyncpa [#allocation3], 1

</llo_original>
